<compile_context>
chip_gen: v5e
topology: v5e:2x2
jax: 0.10.0
libtpu: 0.0.40
codegen_flags: <defaults>
</compile_context>

<pallas_src>
import functools

import jax
import jax.numpy as jnp
from jax import lax
from jax.experimental import pallas as pl
from jax.experimental.pallas import tpu as pltpu

# Module hyperparameters (mirroring LM.py)
N_HIDDEN_LAYERS = 1
R_NODES_PER_LAYER = 100
# Script-level `activation_function = torch.tanh` -> tanh.


def _round_up(n, m):
    return ((n + m - 1) // m) * m


def _pad_axis(a, axis, target):
    """Zero-pad array `a` along `axis` up to length `target`."""
    pad = target - a.shape[axis]
    if pad <= 0:
        return a
    widths = [(0, 0)] * a.ndim
    widths[axis] = (0, pad)
    return jnp.pad(a, widths)


def mlp_kernel(x_ref, w1_ref, b1_ref, w2_ref, b2_ref, o_ref):
    # x:  (TB, IN)        w1: (H_PAD, IN)   PyTorch layout -> contract dim1 vs dim1
    # h:  (TB, H_PAD)     w2: (O_PAD, H_PAD)
    x = x_ref[...]
    h = lax.dot_general(
        x, w1_ref[...],
        dimension_numbers=(((1,), (1,)), ((), ())),
        preferred_element_type=jnp.float32,
    )
    h = jnp.tanh(h + b1_ref[...])            # (TB, H_PAD) + (1, H_PAD), f32, lane-dense
    y = lax.dot_general(
        h, w2_ref[...],
        dimension_numbers=(((1,), (1,)), ((), ())),
        preferred_element_type=jnp.float32,
    )
    o_ref[...] = (y + b2_ref[...]).astype(o_ref.dtype)   # (TB, O_PAD) unmasked store


@functools.partial(jax.jit, static_argnames=("block_batch",))
def fully_connected_nn(x, w1, b1, w2, b2, *, block_batch=512):
    """Forward pass of FullyConnectedNN (1 hidden layer, tanh activation).

    x  : (B, input_size) float32
    w1 : (hidden, input_size)   PyTorch layout (NOT transposed; handled in-kernel)
    b1 : (hidden,)
    w2 : (output, hidden)       PyTorch layout
    b2 : (output,)
    """
    B, in_size = x.shape
    out_size, hidden = w2.shape

    # Lane-dense padded dims.
    h_pad = _round_up(max(hidden, 128), 128)    # 100 -> 128
    o_pad = _round_up(max(out_size, 128), 128)  # 4   -> 128

    # Pad PyTorch-layout parameters with zeros (exact: tanh(0)=0 * zero W2 rows).
    w1_p = _pad_axis(w1, 0, h_pad)                              # (h_pad, in_size)
    b1_p = _pad_axis(b1, 0, h_pad).reshape(1, h_pad)            # (1, h_pad)
    w2_p = _pad_axis(_pad_axis(w2, 1, h_pad), 0, o_pad)         # (o_pad, h_pad)
    b2_p = _pad_axis(b2, 0, o_pad).reshape(1, o_pad)            # (1, o_pad)

    # Batch tiling: sublane-aligned tile, batch zero-padded to a tile multiple.
    tb = min(block_batch, _round_up(B, 8))
    b_pad = pl.cdiv(B, tb) * tb
    x_p = _pad_axis(x, 0, b_pad)                                # (b_pad, in_size)
    grid = (b_pad // tb,)

    def full(shape):
        return pl.BlockSpec(shape, lambda i: (0,) * len(shape))

    flops = 2 * b_pad * in_size * h_pad + 2 * b_pad * h_pad * o_pad
    bytes_accessed = 4 * (x_p.size + w1_p.size + b1_p.size + w2_p.size
                          + b2_p.size + b_pad * o_pad)

    y_pad = pl.pallas_call(
        mlp_kernel,
        out_shape=jax.ShapeDtypeStruct((b_pad, o_pad), x.dtype),
        grid=grid,
        in_specs=[
            pl.BlockSpec((tb, in_size), lambda i: (i, 0)),   # batch tile of x
            full(w1_p.shape),                                # small weights: replicated
            full(b1_p.shape),
            full(w2_p.shape),
            full(b2_p.shape),
        ],
        out_specs=pl.BlockSpec((tb, o_pad), lambda i: (i, 0)),
        compiler_params=pltpu.CompilerParams(
            dimension_semantics=("parallel",),               # shard batch across TCs (v7x)
        ),
        cost_estimate=pl.CostEstimate(
            flops=flops,
            transcendentals=b_pad * h_pad,
            bytes_accessed=bytes_accessed,
        ),
    )(x_p, w1_p, b1_p, w2_p, b2_p)

    # Slice away batch / output padding (layout plumbing only).
    return y_pad[:B, :out_size]


def _torch_linear_init(key, out_features, in_features):
    """Deterministic init matching nn.Linear's U(-1/sqrt(fan_in), 1/sqrt(fan_in))."""
    kw, kb = jax.random.split(key)
    bound = 1.0 / jnp.sqrt(jnp.float32(in_features))
    w = jax.random.uniform(kw, (out_features, in_features), jnp.float32,
                           minval=-bound, maxval=bound)
    b = jax.random.uniform(kb, (out_features,), jnp.float32,
                           minval=-bound, maxval=bound)
    return w, b


if __name__ == "__main__":
    key = jax.random.PRNGKey(0)
    k_x, k_l1, k_l2 = jax.random.split(key, 3)

    batch = 8
    input_size = 16
    hidden = R_NODES_PER_LAYER   # 100
    output_size = 4

    x = jax.random.normal(k_x, (batch, input_size), jnp.float32)
    w1, b1 = _torch_linear_init(k_l1, hidden, input_size)
    w2, b2 = _torch_linear_init(k_l2, output_size, hidden)

    y = fully_connected_nn(x, w1, b1, w2, b2)
    y = jax.block_until_ready(y)

    # Reference check in plain JAX (PyTorch semantics: x @ W^T + b).
    ref = jnp.tanh(x @ w1.T + b1) @ w2.T + b2
    assert y.shape == (batch, output_size)
    assert jnp.allclose(y, ref, atol=1e-5, rtol=1e-5)

    print("KERNEL_OK")
</pallas_src>

<mosaic_0001>
module attributes {stable_mosaic.version = 11 : i64} {
  func.func @mlp_kernel(%arg0: i32, %arg1: memref<8x16xf32, #tpu.memory_space<vmem>>, %arg2: memref<128x16xf32, #tpu.memory_space<vmem>>, %arg3: memref<1x128xf32, #tpu.memory_space<vmem>>, %arg4: memref<128x128xf32, #tpu.memory_space<vmem>>, %arg5: memref<1x128xf32, #tpu.memory_space<vmem>>, %arg6: memref<8x128xf32, #tpu.memory_space<vmem>>) attributes {dimension_semantics = [#tpu.dimension_semantics<parallel>], iteration_bounds = array<i64: 1>, scalar_prefetch = 0 : i64, scratch_operands = 0 : i64, tpu.core_type = #tpu.core_type<tc>, window_params = [{transform_indices = @transform_0, window_bounds = array<i64: 8, 16>}, {pipeline_mode = #tpu.pipeline_mode<synchronous>, transform_indices = @transform_1, window_bounds = array<i64: 128, 16>}, {pipeline_mode = #tpu.pipeline_mode<synchronous>, transform_indices = @transform_2, window_bounds = array<i64: 1, 128>}, {pipeline_mode = #tpu.pipeline_mode<synchronous>, transform_indices = @transform_3, window_bounds = array<i64: 128, 128>}, {pipeline_mode = #tpu.pipeline_mode<synchronous>, transform_indices = @transform_4, window_bounds = array<i64: 1, 128>}, {transform_indices = @transform_5, window_bounds = array<i64: 8, 128>}]} {
    %c0 = arith.constant 0 : index
    %c0_0 = arith.constant 0 : index
    %0 = vector.load %arg1[%c0, %c0_0] : memref<8x16xf32, #tpu.memory_space<vmem>>, vector<8x16xf32>
    %c0_1 = arith.constant 0 : index
    %c0_2 = arith.constant 0 : index
    %1 = vector.load %arg2[%c0_1, %c0_2] : memref<128x16xf32, #tpu.memory_space<vmem>>, vector<128x16xf32>
    %cst = arith.constant dense<0.000000e+00> : vector<8x128xf32>
    %2 = tpu.matmul %0, %1, %cst {dimension_numbers = #tpu.dot_dimension_numbers<[1], [1], [0], [0], [0, 0, 1, 0], [], []>} : vector<8x16xf32>, vector<128x16xf32>, vector<8x128xf32> -> vector<8x128xf32>
    %c0_3 = arith.constant 0 : index
    %c0_4 = arith.constant 0 : index
    %3 = vector.load %arg3[%c0_3, %c0_4] : memref<1x128xf32, #tpu.memory_space<vmem>>, vector<1x128xf32>
    %4 = vector.broadcast %3 : vector<1x128xf32> to vector<8x128xf32>
    %5 = arith.addf %2, %4 : vector<8x128xf32>
    %6 = math.tanh %5 : vector<8x128xf32>
    %c0_5 = arith.constant 0 : index
    %c0_6 = arith.constant 0 : index
    %7 = vector.load %arg4[%c0_5, %c0_6] : memref<128x128xf32, #tpu.memory_space<vmem>>, vector<128x128xf32>
    %cst_7 = arith.constant dense<0.000000e+00> : vector<8x128xf32>
    %8 = tpu.matmul %6, %7, %cst_7 {dimension_numbers = #tpu.dot_dimension_numbers<[1], [1], [0], [0], [0, 0, 1, 0], [], []>} : vector<8x128xf32>, vector<128x128xf32>, vector<8x128xf32> -> vector<8x128xf32>
    %c0_8 = arith.constant 0 : index
    %c0_9 = arith.constant 0 : index
    %9 = vector.load %arg5[%c0_8, %c0_9] : memref<1x128xf32, #tpu.memory_space<vmem>>, vector<1x128xf32>
    %10 = vector.broadcast %9 : vector<1x128xf32> to vector<8x128xf32>
    %11 = arith.addf %8, %10 : vector<8x128xf32>
    %c0_10 = arith.constant 0 : index
    %c0_11 = arith.constant 0 : index
    %12 = vector.load %arg6[%c0_10, %c0_11] : memref<8x128xf32, #tpu.memory_space<vmem>>, vector<8x128xf32>
    tpu.vector_store %arg6[%c0_10, %c0_11], %11 {strides = array<i32>} : memref<8x128xf32, #tpu.memory_space<vmem>>, vector<8x128xf32>,
    return
  }
  func.func @transform_0(%arg0: i32) -> (i32, i32) {
    %c0_i32 = arith.constant 0 : i32
    %c0_i32_0 = arith.constant 0 : i32
    return %arg0, %c0_i32 : i32, i32
  }
  func.func @transform_1(%arg0: i32) -> (i32, i32) {
    %c0_i32 = arith.constant 0 : i32
    %c0_i32_0 = arith.constant 0 : i32
    %c0_i32_1 = arith.constant 0 : i32
    return %c0_i32, %c0_i32_0 : i32, i32
  }
  func.func @transform_2(%arg0: i32) -> (i32, i32) {
    %c0_i32 = arith.constant 0 : i32
    %c0_i32_0 = arith.constant 0 : i32
    %c0_i32_1 = arith.constant 0 : i32
    return %c0_i32, %c0_i32_0 : i32, i32
  }
  func.func @transform_3(%arg0: i32) -> (i32, i32) {
    %c0_i32 = arith.constant 0 : i32
    %c0_i32_0 = arith.constant 0 : i32
    %c0_i32_1 = arith.constant 0 : i32
    return %c0_i32, %c0_i32_0 : i32, i32
  }
  func.func @transform_4(%arg0: i32) -> (i32, i32) {
    %c0_i32 = arith.constant 0 : i32
    %c0_i32_0 = arith.constant 0 : i32
    %c0_i32_1 = arith.constant 0 : i32
    return %c0_i32, %c0_i32_0 : i32, i32
  }
  func.func @transform_5(%arg0: i32) -> (i32, i32) {
    %c0_i32 = arith.constant 0 : i32
    %c0_i32_0 = arith.constant 0 : i32
    return %arg0, %c0_i32 : i32, i32
  }
}

</mosaic_0001>

<llo_original>
// kernel: fully_connected_nn.1
$region0: #{fully_connected_nn.1}
  #allocation0 [shape = 'u32[]', space=smem, size = 0x4, offset = 0x4, fixed_abs, tag = 'smem constant byte address 0x4 - core index']
  #allocation1 [shape = 'u32[72,128]{1,0:T(1,128)}', space=vmem, size = 0x9000, scoped, tag = 'internal scratch']
  %s0 = inlined_call_operand.vmem [shape: f32[8,16], index: 0, kind: input, shape index: {}]
  %s1 = inlined_call_operand.vmem [shape: f32[128,16], index: 1, kind: input, shape index: {}]
  %s2 = inlined_call_operand.vmem [shape: f32[1,128], index: 2, kind: input, shape index: {}]
  %s3 = inlined_call_operand.vmem [shape: f32[128,128], index: 3, kind: input, shape index: {}]
  %s4 = inlined_call_operand.vmem [shape: f32[1,128], index: 4, kind: input, shape index: {}]
  %s5 = inlined_call_operand.vmem [shape: f32[8,128], index: 5, kind: output, shape index: {}]
  %s6 = sld [smem:[#allocation0]]
  $region30: #{fully_connected_nn.1} parent=0
    _
  %s8 = ssub.s32 1, %s6
  %s9 = scalar_select 0, %s8, %s6
  // Predicated region
  $region2: #{fully_connected_nn.1} parent=0 // pred_check
    _
  $region3: #{fully_connected_nn.1} parent=0 // pred_check_branch
    %11 = sbr.rel (0) target = $region5
  $region4: #{fully_connected_nn.1} parent=0 // pred_region
    _
  $region5: #{fully_connected_nn.1} parent=0 // pred_fallthru
    _
  // Predicated region
  $region6: #{fully_connected_nn.1} parent=0 // pred_check
    _
  $region7: #{fully_connected_nn.1} parent=0 // pred_check_branch
    %13 = sbr.rel (0) target = $region9
  $region8: #{fully_connected_nn.1} parent=0 // pred_region
    _
  $region9: #{fully_connected_nn.1} parent=0 // pred_fallthru
    _
  // Predicated region
  $region10: #{fully_connected_nn.1} parent=0 // pred_check
    _
  $region11: #{fully_connected_nn.1} parent=0 // pred_check_branch
    %15 = sbr.rel (0) target = $region13
  $region12: #{fully_connected_nn.1} parent=0 // pred_region
    _
  $region13: #{fully_connected_nn.1} parent=0 // pred_fallthru
    _
  // Predicated region
  $region14: #{fully_connected_nn.1} parent=0 // pred_check
    _
  $region15: #{fully_connected_nn.1} parent=0 // pred_check_branch
    %17 = sbr.rel (0) target = $region17
  $region16: #{fully_connected_nn.1} parent=0 // pred_region
    _
  $region17: #{fully_connected_nn.1} parent=0 // pred_fallthru
    _
  // Predicated region
  $region18: #{fully_connected_nn.1} parent=0 // pred_check
    _
  $region19: #{fully_connected_nn.1} parent=0 // pred_check_branch
    %19 = sbr.rel (0) target = $region21
  $region20: #{fully_connected_nn.1} parent=0 // pred_region
    _
  $region21: #{fully_connected_nn.1} parent=0 // pred_fallthru
    _
  %v20 = vld [vmem:[%s0] sm:$0xff]
  %v21 = vld [vmem:[%s1] sm:$0xff]
  %v22 = vld [vmem:[%s1 + $0x8] sm:$0xff]
  %v23 = vld [vmem:[%s1 + $0x10] sm:$0xff]
  %v24 = vld [vmem:[%s1 + $0x18] sm:$0xff]
  %v25 = vld [vmem:[%s1 + $0x20] sm:$0xff]
  %v26 = vld [vmem:[%s1 + $0x28] sm:$0xff]
  %v27 = vld [vmem:[%s1 + $0x30] sm:$0xff]
  %v28 = vld [vmem:[%s1 + $0x38] sm:$0xff]
  %v29 = vld [vmem:[%s1 + $0x40] sm:$0xff]
  %v30 = vld [vmem:[%s1 + $0x48] sm:$0xff]
  %v31 = vld [vmem:[%s1 + $0x50] sm:$0xff]
  %v32 = vld [vmem:[%s1 + $0x58] sm:$0xff]
  %v33 = vld [vmem:[%s1 + $0x60] sm:$0xff]
  %v34 = vld [vmem:[%s1 + $0x68] sm:$0xff]
  %v35 = vld [vmem:[%s1 + $0x70] sm:$0xff]
  %v36 = vld [vmem:[%s1 + $0x78] sm:$0xff]
  %v37 = vld [vmem:[%s2] sm:$0x1]
  %v39 = vperm.slane %v37, 0
  %vm41 = vcmask 130048
  %v43 = vsel %vm41, %v20, 0
  %v46 = vsel %vm41, %v21, 0
  %v49 = vsel %vm41, %v22, 0
  %v52 = vsel %vm41, %v23, 0
  %v55 = vsel %vm41, %v24, 0
  %v58 = vsel %vm41, %v25, 0
  %v61 = vsel %vm41, %v26, 0
  %v64 = vsel %vm41, %v27, 0
  %v67 = vsel %vm41, %v28, 0
  %v70 = vsel %vm41, %v29, 0
  %v73 = vsel %vm41, %v30, 0
  %v76 = vsel %vm41, %v31, 0
  %v79 = vsel %vm41, %v32, 0
  %v82 = vsel %vm41, %v33, 0
  %v85 = vsel %vm41, %v34, 0
  %v88 = vsel %vm41, %v35, 0
  %v91 = vsel %vm41, %v36, 0
  %93 = vmatpush.xpose.msra.mxu0 %v91
  %94 = vmatpush.xpose.msra.mxu0 %v88
  %95 = vmatpush.xpose.msra.mxu0 %v85
  %96 = vmatpush.xpose.msra.mxu0 %v82
  %97 = vmatpush.xpose.msra.mxu0 %v79
  %98 = vmatpush.xpose.msra.mxu0 %v76
  %99 = vmatpush.xpose.msra.mxu0 %v73
  %100 = vmatpush.xpose.msra.mxu0 %v70
  %101 = vmatpush.xpose.msra.mxu0 %v67
  %102 = vmatpush.xpose.msra.mxu0 %v64
  %103 = vmatpush.xpose.msra.mxu0 %v61
  %104 = vmatpush.xpose.msra.mxu0 %v58
  %105 = vmatpush.xpose.msra.mxu0 %v55
  %106 = vmatpush.xpose.msra.mxu0 %v52
  %107 = vmatpush.xpose.msra.mxu0 %v49
  %108 = vmatpush.xpose.msra.mxu0 %v46
  %109 = vmatmul.f32.gmra.mxu0 %v43
  %v110 = vpop.f32.mrf.mxu0
  %v111 = vadd.f32 %v39, %v110
  %112 = vdwg.mxu0
  %v113 = vtanh.pop %v111
  %v114 = vld [vmem:[%s3] sm:$0xff]
  %v115 = vld [vmem:[%s3 + $0x8] sm:$0xff]
  %v116 = vld [vmem:[%s3 + $0x10] sm:$0xff]
  %v117 = vld [vmem:[%s3 + $0x18] sm:$0xff]
  %v118 = vld [vmem:[%s3 + $0x20] sm:$0xff]
  %v119 = vld [vmem:[%s3 + $0x28] sm:$0xff]
  %v120 = vld [vmem:[%s3 + $0x30] sm:$0xff]
  %v121 = vld [vmem:[%s3 + $0x38] sm:$0xff]
  %v122 = vld [vmem:[%s3 + $0x40] sm:$0xff]
  %v123 = vld [vmem:[%s3 + $0x48] sm:$0xff]
  %v124 = vld [vmem:[%s3 + $0x50] sm:$0xff]
  %v125 = vld [vmem:[%s3 + $0x58] sm:$0xff]
  %v126 = vld [vmem:[%s3 + $0x60] sm:$0xff]
  %v127 = vld [vmem:[%s3 + $0x68] sm:$0xff]
  %v128 = vld [vmem:[%s3 + $0x70] sm:$0xff]
  %v129 = vld [vmem:[%s3 + $0x78] sm:$0xff]
  %v130 = vld [vmem:[%s4] sm:$0x1]
  %v132 = vperm.slane %v130, 0
  %134 = vmatpush.xpose.msra.mxu0 %v129
  %135 = vmatpush.xpose.msra.mxu0 %v128
  %136 = vmatpush.xpose.msra.mxu0 %v127
  %137 = vmatpush.xpose.msra.mxu0 %v126
  %138 = vmatpush.xpose.msra.mxu0 %v125
  %139 = vmatpush.xpose.msra.mxu0 %v124
  %140 = vmatpush.xpose.msra.mxu0 %v123
  %141 = vmatpush.xpose.msra.mxu0 %v122
  %142 = vmatpush.xpose.msra.mxu0 %v121
  %143 = vmatpush.xpose.msra.mxu0 %v120
  %144 = vmatpush.xpose.msra.mxu0 %v119
  %145 = vmatpush.xpose.msra.mxu0 %v118
  %146 = vmatpush.xpose.msra.mxu0 %v117
  %147 = vmatpush.xpose.msra.mxu0 %v116
  %148 = vmatpush.xpose.msra.mxu0 %v115
  %149 = vmatpush.xpose.msra.mxu0 %v114
  %150 = vmatmul.f32.gmra.mxu0 %v113
  %v151 = vpop.f32.mrf.mxu0
  %v152 = vadd.f32 %v132, %v151
  %153 = vdwg.mxu0
  %154 = vst [vmem:[%s5] sm:$0xff] %v152
  // Predicated region
  $region22: #{fully_connected_nn.1} parent=0 // pred_check
    _
  $region23: #{fully_connected_nn.1} parent=0 // pred_check_branch
    %156 = sbr.rel (0) target = $region25
  $region24: #{fully_connected_nn.1} parent=0 // pred_region
    _
  $region25: #{fully_connected_nn.1} parent=0 // pred_fallthru
    _
  // Predicated region
  $region26: #{fully_connected_nn.1} parent=0 // pred_check
    _
  $region27: #{fully_connected_nn.1} parent=0 // pred_check_branch
    %158 = sbr.rel (0) target = $region29
  $region28: #{fully_connected_nn.1} parent=0 // pred_region
    _
  $region29: #{fully_connected_nn.1} parent=0 // pred_fallthru
    _

</llo_original>
